<compile_context>
chip_gen: v5e
topology: v5e:2x2
jax: 0.10.0
libtpu: 0.0.40
codegen_flags: <defaults>
</compile_context>

<pallas_src>
import functools

import jax
import jax.numpy as jnp
from jax import lax
from jax.experimental import pallas as pl
from jax.experimental.pallas import tpu as pltpu


# --------------------------------------------------------------------------- helpers
def _round_up(x, m):
    return (x + m - 1) // m * m


def _apply_act(y, act):
    if act == "lrelu":
        return jnp.where(y >= 0, y, 0.2 * y)
    if act == "relu":
        return jnp.maximum(y, 0.0)
    if act == "tanh":
        return jnp.tanh(y)
    return y


# ------------------------------------------------------------------- static tap tables
# Conv2d(k=4, s=2, p=1): out[u,v] = sum_{r,s} x_pad[2u+r, 2v+s] . W[r,s]
# Tap (r, s) reads variant vi = (r % 2) * 4 + s at row offset a = r // 2.
CONV_TAPS = (
    tuple(((r % 2) * 4 + s, r // 2, r * 4 + s) for r in range(4) for s in range(4)),
)

# ConvTranspose2d(k=4, s=2, p=1), sub-pixel form: output phase (p, q) at (u, v) =
#   sum_{a,b in {0,1}} x_pad1[p+u+a, q+v+b] . W[:, :, 3-p-2a, 3-q-2b]
# Tap (a, b) of output phase po reads column variant (po%2)+b at row offset (po//2)+a.
CONVT_TAPS = tuple(
    tuple(((po % 2) + b, (po // 2) + a, po * 4 + a * 2 + b)
          for a in range(2) for b in range(2))
    for po in range(4)
)


def _conv_tap_weights(w):
    """(Cout, Cin, 4, 4) torch Conv2d weight -> (16, Cin, Cout) bf16 tap panel."""
    mats = [jnp.transpose(w[:, :, r, s], (1, 0)) for r in range(4) for s in range(4)]
    return jnp.stack(mats, axis=0).astype(jnp.bfloat16)


def _convt_tap_weights(w):
    """(Cin, Cout, 4, 4) torch ConvTranspose2d weight -> (16, Cin, Cout) bf16 panel."""
    mats = []
    for po in range(4):
        p, q = po // 2, po % 2
        for a in range(2):
            for b in range(2):
                mats.append(w[:, :, 3 - p - 2 * a, 3 - q - 2 * b])
    return jnp.stack(mats, axis=0).astype(jnp.bfloat16)


# ---------------------------------------------------------------------- Pallas kernels
def _tap_gemm_kernel(x_ref, w_ref, *out_refs, taps, oh, wcols, act, with_bn):
    """Fused conv-as-tap-GEMM (+ optional BN statistics) for one batch element.

    x_ref : (1, V, R*wcols, Cin) bf16  tap-variant input (junk columns are zero)
    w_ref : (16, Cin, Cout)      bf16  tap-stacked weights
    y_ref : (1, P_out, oh*wcols, Cout) pre-activation f32 (BN) / activated bf16
    s_ref, q_ref : (1, Cout) f32 per-channel sum / sum-of-squares accumulated over the
                   batch grid axis (BN layers only).
    """
    if with_bn:
        y_ref, s_ref, q_ref = out_refs

        @pl.when(pl.program_id(0) == 0)
        def _():
            s_ref[...] = jnp.zeros_like(s_ref)
            q_ref[...] = jnp.zeros_like(q_ref)
    else:
        (y_ref,) = out_refs

    for po, tap_list in enumerate(taps):
        acc = None
        for (vi, a, wi) in tap_list:
            lhs = x_ref[0, vi, a * wcols:(a + oh) * wcols, :]      # (oh*wcols, Cin)
            d = jnp.dot(lhs, w_ref[wi], preferred_element_type=jnp.float32)
            acc = d if acc is None else acc + d
        if with_bn:
            # Padded columns are exactly zero, so they do not perturb the statistics.
            s_ref[...] += jnp.sum(acc, axis=0, keepdims=True)
            q_ref[...] += jnp.sum(acc * acc, axis=0, keepdims=True)
            y_ref[0, po] = acc.astype(y_ref.dtype)
        else:
            y_ref[0, po] = _apply_act(acc, act).astype(y_ref.dtype)


def _scale_shift_act_kernel(y_ref, sc_ref, sh_ref, o_ref, *, act):
    sc = sc_ref[...].reshape(1, 1, 1, -1)
    sh = sh_ref[...].reshape(1, 1, 1, -1)
    o_ref[...] = _apply_act(y_ref[...] * sc + sh, act).astype(o_ref.dtype)


# ------------------------------------------------------------------- layer glue (XLA)
def _conv_variants(x_nhwc):
    """Row-parity x column-tap variants for Conv2d(k=4, s=2, p=1).

    Returns (N, 8, (OH+1)*OWp, C) bf16 with OWp = OW rounded up to 8; columns beyond
    OW are zero so they contribute nothing to the tap GEMMs.
    """
    n, h, w, c = x_nhwc.shape
    oh, ow = h // 2, w // 2
    owp = _round_up(ow, 8)
    xp = jnp.pad(x_nhwc.astype(jnp.bfloat16), ((0, 0), (1, 1), (1, 1), (0, 0)))
    vs = []
    for p in (0, 1):
        for s in range(4):
            vs.append(xp[:, p:p + 2 * oh + 1:2, s:s + 2 * ow:2, :])  # (N, OH+1, OW, C)
    v = jnp.stack(vs, axis=1)                                        # (N, 8, OH+1, OW, C)
    if owp != ow:
        v = jnp.pad(v, ((0, 0), (0, 0), (0, 0), (0, owp - ow), (0, 0)))
    return v.reshape(n, 8, (oh + 1) * owp, c), oh, ow, owp


def _convt_variants(x_nhwc):
    """Column-shift variants for ConvTranspose2d(k=4, s=2, p=1) in sub-pixel form.

    Returns (N, 3, (H+2)*Wp, C) bf16 with Wp = W rounded up to 8.
    """
    n, h, w, c = x_nhwc.shape
    wp = _round_up(w, 8)
    xp = jnp.pad(x_nhwc.astype(jnp.bfloat16), ((0, 0), (1, 1), (1, 1), (0, 0)))
    vs = [xp[:, :, cs:cs + w, :] for cs in range(3)]                 # (N, H+2, W, C)
    v = jnp.stack(vs, axis=1)                                        # (N, 3, H+2, W, C)
    if wp != w:
        v = jnp.pad(v, ((0, 0), (0, 0), (0, 0), (0, wp - w), (0, 0)))
    return v.reshape(n, 3, (h + 2) * wp, c), h, w, wp


def _tap_conv(v, w_taps, taps, oh, wcols, act, bn, valid_cols):
    """Run the fused tap-GEMM (+ BN) pipeline. Returns (N, P_out, oh*wcols, Cout)."""
    n = v.shape[0]
    p_out = len(taps)
    m = oh * wcols
    cout = w_taps.shape[-1]
    with_bn = bn is not None

    kernel = functools.partial(_tap_gemm_kernel, taps=taps, oh=oh, wcols=wcols,
                               act=act, with_bn=with_bn)
    x_block = (1,) + tuple(v.shape[1:])
    in_specs = [
        pl.BlockSpec(x_block, lambda i: (i, 0, 0, 0)),
        pl.BlockSpec(tuple(w_taps.shape), lambda i: (0, 0, 0)),
    ]
    y_spec = pl.BlockSpec((1, p_out, m, cout), lambda i: (i, 0, 0, 0))

    if with_bn:
        out_shape = (
            jax.ShapeDtypeStruct((n, p_out, m, cout), jnp.float32),
            jax.ShapeDtypeStruct((1, cout), jnp.float32),
            jax.ShapeDtypeStruct((1, cout), jnp.float32),
        )
        out_specs = (y_spec,
                     pl.BlockSpec((1, cout), lambda i: (0, 0)),
                     pl.BlockSpec((1, cout), lambda i: (0, 0)))
        sem = ("arbitrary",)        # stats accumulate across the batch grid axis
    else:
        out_shape = jax.ShapeDtypeStruct((n, p_out, m, cout), jnp.bfloat16)
        out_specs = y_spec
        sem = ("parallel",)

    res = pl.pallas_call(
        kernel,
        out_shape=out_shape,
        grid=(n,),
        in_specs=in_specs,
        out_specs=out_specs,
        compiler_params=pltpu.CompilerParams(dimension_semantics=sem),
    )(v, w_taps)

    if not with_bn:
        return res

    y, s, q = res
    gamma, beta = bn
    m_true = float(n * p_out * oh * valid_cols)
    mean = s[0] / m_true
    var = jnp.maximum(q[0] / m_true - mean * mean, 0.0)   # biased var (PyTorch BN norm)
    scale = gamma / jnp.sqrt(var + 1e-5)
    shift = beta - mean * scale

    return pl.pallas_call(
        functools.partial(_scale_shift_act_kernel, act=act),
        out_shape=jax.ShapeDtypeStruct((n, p_out, m, cout), jnp.bfloat16),
        grid=(n,),
        in_specs=[
            pl.BlockSpec((1, p_out, m, cout), lambda i: (i, 0, 0, 0)),
            pl.BlockSpec((1, cout), lambda i: (0, 0)),
            pl.BlockSpec((1, cout), lambda i: (0, 0)),
        ],
        out_specs=pl.BlockSpec((1, p_out, m, cout), lambda i: (i, 0, 0, 0)),
        compiler_params=pltpu.CompilerParams(dimension_semantics=("parallel",)),
    )(y, scale.reshape(1, cout).astype(jnp.float32),
      shift.reshape(1, cout).astype(jnp.float32))


def conv4x4_s2(x_nhwc, w_taps, act, bn=None):
    """Conv2d(k=4, s=2, p=1, bias=False) + optional BN + activation (NHWC in/out)."""
    n = x_nhwc.shape[0]
    cout = w_taps.shape[-1]
    v, oh, ow, owp = _conv_variants(x_nhwc)
    y = _tap_conv(v, w_taps, CONV_TAPS, oh, owp, act, bn, valid_cols=ow)
    return y[:, 0].reshape(n, oh, owp, cout)[:, :, :ow, :]


def convT4x4_s2(x_nhwc, w_taps, act, bn=None):
    """ConvTranspose2d(k=4, s=2, p=1, bias=False) + optional BN + act (NHWC in/out)."""
    n = x_nhwc.shape[0]
    cout = w_taps.shape[-1]
    v, h, w, wp = _convt_variants(x_nhwc)
    y = _tap_conv(v, w_taps, CONVT_TAPS, h, wp, act, bn, valid_cols=w)
    y = y.reshape(n, 2, 2, h, wp, cout)[:, :, :, :, :w, :]
    return jnp.transpose(y, (0, 3, 1, 4, 2, 5)).reshape(n, 2 * h, 2 * w, cout)


# ------------------------------------------------------------------ model definition
def init_encoder_params(key, in_channels, nef):
    ks = jax.random.split(key, 4)
    std = 0.02
    w1 = std * jax.random.normal(ks[0], (nef, in_channels, 4, 4), jnp.float32)
    w2 = std * jax.random.normal(ks[1], (2 * nef, nef, 4, 4), jnp.float32)
    w3 = std * jax.random.normal(ks[2], (4 * nef, 2 * nef, 4, 4), jnp.float32)
    w4 = std * jax.random.normal(ks[3], (8 * nef, 4 * nef, 4, 4), jnp.float32)
    return {
        "w1": _conv_tap_weights(w1),
        "w2": _conv_tap_weights(w2),
        "g2": jnp.ones((2 * nef,), jnp.float32), "b2": jnp.zeros((2 * nef,), jnp.float32),
        "w3": _conv_tap_weights(w3),
        "g3": jnp.ones((4 * nef,), jnp.float32), "b3": jnp.zeros((4 * nef,), jnp.float32),
        "w4": _conv_tap_weights(w4),
        "g4": jnp.ones((8 * nef,), jnp.float32), "b4": jnp.zeros((8 * nef,), jnp.float32),
    }


def init_decoder_params(key, out_channels, ndf):
    ks = jax.random.split(key, 4)
    std = 0.02
    w1 = std * jax.random.normal(ks[0], (8 * ndf, 4 * ndf, 4, 4), jnp.float32)
    w2 = std * jax.random.normal(ks[1], (4 * ndf, 2 * ndf, 4, 4), jnp.float32)
    w3 = std * jax.random.normal(ks[2], (2 * ndf, ndf, 4, 4), jnp.float32)
    w4 = std * jax.random.normal(ks[3], (ndf, out_channels, 4, 4), jnp.float32)
    return {
        "w1": _convt_tap_weights(w1),
        "g1": jnp.ones((4 * ndf,), jnp.float32), "b1": jnp.zeros((4 * ndf,), jnp.float32),
        "w2": _convt_tap_weights(w2),
        "g2": jnp.ones((2 * ndf,), jnp.float32), "b2": jnp.zeros((2 * ndf,), jnp.float32),
        "w3": _convt_tap_weights(w3),
        "g3": jnp.ones((ndf,), jnp.float32), "b3": jnp.zeros((ndf,), jnp.float32),
        "w4": _convt_tap_weights(w4),
    }


def init_ganomaly2d_params(key, r=16):
    nef = 64 // r
    k1, k2, k3 = jax.random.split(key, 3)
    return {
        "G_E": init_encoder_params(k1, 3, nef),
        "G_D": init_decoder_params(k2, 3, nef),
        "E": init_encoder_params(k3, 3, nef),
    }


def encoder_forward(p, x_nhwc):
    x = conv4x4_s2(x_nhwc, p["w1"], act="lrelu")
    x = conv4x4_s2(x, p["w2"], act="lrelu", bn=(p["g2"], p["b2"]))
    x = conv4x4_s2(x, p["w3"], act="lrelu", bn=(p["g3"], p["b3"]))
    x = conv4x4_s2(x, p["w4"], act="lrelu", bn=(p["g4"], p["b4"]))
    return x


def decoder_forward(p, z_nhwc):
    x = convT4x4_s2(z_nhwc, p["w1"], act="relu", bn=(p["g1"], p["b1"]))
    x = convT4x4_s2(x, p["w2"], act="relu", bn=(p["g2"], p["b2"]))
    x = convT4x4_s2(x, p["w3"], act="relu", bn=(p["g3"], p["b3"]))
    x = convT4x4_s2(x, p["w4"], act="tanh")
    return x


@jax.jit
def ganomaly2d_forward(params, x_nchw):
    """Returns (z, z_) in NCHW, matching the PyTorch forward()."""
    x = jnp.transpose(x_nchw, (0, 2, 3, 1))                    # NCHW -> NHWC
    z = encoder_forward(params["G_E"], x)
    x_rec = decoder_forward(params["G_D"], z)
    z_ = encoder_forward(params["E"], x_rec)
    to_nchw = lambda t: jnp.transpose(t, (0, 3, 1, 2)).astype(jnp.float32)
    return to_nchw(z), to_nchw(z_)


# ------------------------------------------------------------------------------ main
if __name__ == "__main__":
    key = jax.random.PRNGKey(0)
    kp, kx, k1, k2, k3, k4 = jax.random.split(key, 6)

    # --- unit check 1: Conv2d(4, s=2, p=1) kernel vs XLA reference -----------------
    xc = jax.random.normal(k1, (2, 8, 8, 3), jnp.float32)
    wc = 0.1 * jax.random.normal(k2, (8, 3, 4, 4), jnp.float32)      # (Cout, Cin, 4, 4)
    y_k = conv4x4_s2(xc, _conv_tap_weights(wc), act="none").astype(jnp.float32)
    y_ref = lax.conv_general_dilated(
        xc.astype(jnp.bfloat16).astype(jnp.float32),
        jnp.transpose(wc, (2, 3, 1, 0)).astype(jnp.bfloat16).astype(jnp.float32),
        window_strides=(2, 2), padding=((1, 1), (1, 1)),
        dimension_numbers=("NHWC", "HWIO", "NHWC"),
        precision=lax.Precision.HIGHEST)
    assert bool(jnp.allclose(y_k, y_ref, atol=3e-2, rtol=3e-2)), "conv4x4_s2 mismatch"

    # --- unit check 2: ConvTranspose2d(4, s=2, p=1) kernel vs XLA reference --------
    xt = jax.random.normal(k3, (2, 4, 4, 8), jnp.float32)
    wt = 0.1 * jax.random.normal(k4, (8, 3, 4, 4), jnp.float32)      # (Cin, Cout, 4, 4)
    y_k = convT4x4_s2(xt, _convt_tap_weights(wt), act="none").astype(jnp.float32)
    w_hwio = jnp.transpose(wt[:, :, ::-1, ::-1], (2, 3, 0, 1))       # flipped, HWIO
    y_ref = lax.conv_general_dilated(
        xt.astype(jnp.bfloat16).astype(jnp.float32),
        w_hwio.astype(jnp.bfloat16).astype(jnp.float32),
        window_strides=(1, 1), padding=((2, 2), (2, 2)), lhs_dilation=(2, 2),
        dimension_numbers=("NHWC", "HWIO", "NHWC"),
        precision=lax.Precision.HIGHEST)
    assert bool(jnp.allclose(y_k, y_ref, atol=3e-2, rtol=3e-2)), "convT4x4_s2 mismatch"

    # --- full GANomaly2D forward ----------------------------------------------------
    r = 16                                    # 64 // r = 4 base channels (small test)
    params = init_ganomaly2d_params(kp, r=r)
    x = jax.random.normal(kx, (2, 3, 32, 32), jnp.float32)   # NCHW, 3 input channels

    z, z_ = ganomaly2d_forward(params, x)
    jax.block_until_ready((z, z_))

    assert z.shape == (2, (64 // r) * 8, 2, 2), z.shape
    assert z_.shape == z.shape, z_.shape
    assert bool(jnp.all(jnp.isfinite(z))) and bool(jnp.all(jnp.isfinite(z_)))
    print("KERNEL_OK")
</pallas_src>

<mosaic_0001>
module attributes {stable_mosaic.version = 11 : i64} {
  func.func @_tap_gemm_kernel(%arg0: i32, %arg1: memref<1x8x40x3xbf16, #tpu.memory_space<vmem>>, %arg2: memref<16x3x8xbf16, #tpu.memory_space<vmem>>, %arg3: memref<1x1x32x8xbf16, #tpu.memory_space<vmem>>) attributes {dimension_semantics = [#tpu.dimension_semantics<parallel>], iteration_bounds = array<i64: 2>, scalar_prefetch = 0 : i64, scratch_operands = 0 : i64, tpu.core_type = #tpu.core_type<tc>, window_params = [{transform_indices = @transform_0, window_bounds = array<i64: 1, 8, 40, 3>}, {pipeline_mode = #tpu.pipeline_mode<synchronous>, transform_indices = @transform_1, window_bounds = array<i64: 16, 3, 8>}, {transform_indices = @transform_2, window_bounds = array<i64: 1, 1, 32, 8>}]} {
    %c0 = arith.constant 0 : index
    %c0_0 = arith.constant 0 : index
    %c0_1 = arith.constant 0 : index
    %c0_2 = arith.constant 0 : index
    %0 = vector.load %arg1[%c0, %c0_0, %c0_1, %c0_2] : memref<1x8x40x3xbf16, #tpu.memory_space<vmem>>, vector<1x1x32x3xbf16>
    %1 = vector.shape_cast %0 : vector<1x1x32x3xbf16> to vector<32x3xbf16>
    %c0_3 = arith.constant 0 : index
    %c0_4 = arith.constant 0 : index
    %c0_5 = arith.constant 0 : index
    %2 = vector.load %arg2[%c0_3, %c0_4, %c0_5] : memref<16x3x8xbf16, #tpu.memory_space<vmem>>, vector<1x3x8xbf16>
    %3 = vector.shape_cast %2 : vector<1x3x8xbf16> to vector<3x8xbf16>
    %cst = arith.constant dense<0.000000e+00> : vector<32x8xf32>
    %4 = tpu.matmul %1, %3, %cst {dimension_numbers = #tpu.dot_dimension_numbers<[1], [0], [0], [1], [0, 0, 1, 1], [], []>} : vector<32x3xbf16>, vector<3x8xbf16>, vector<32x8xf32> -> vector<32x8xf32>
    %c0_6 = arith.constant 0 : index
    %c1 = arith.constant 1 : index
    %c0_7 = arith.constant 0 : index
    %c0_8 = arith.constant 0 : index
    %5 = vector.load %arg1[%c0_6, %c1, %c0_7, %c0_8] : memref<1x8x40x3xbf16, #tpu.memory_space<vmem>>, vector<1x1x32x3xbf16>
    %6 = vector.shape_cast %5 : vector<1x1x32x3xbf16> to vector<32x3xbf16>
    %c1_9 = arith.constant 1 : index
    %c0_10 = arith.constant 0 : index
    %c0_11 = arith.constant 0 : index
    %7 = vector.load %arg2[%c1_9, %c0_10, %c0_11] : memref<16x3x8xbf16, #tpu.memory_space<vmem>>, vector<1x3x8xbf16>
    %8 = vector.shape_cast %7 : vector<1x3x8xbf16> to vector<3x8xbf16>
    %cst_12 = arith.constant dense<0.000000e+00> : vector<32x8xf32>
    %9 = tpu.matmul %6, %8, %cst_12 {dimension_numbers = #tpu.dot_dimension_numbers<[1], [0], [0], [1], [0, 0, 1, 1], [], []>} : vector<32x3xbf16>, vector<3x8xbf16>, vector<32x8xf32> -> vector<32x8xf32>
    %10 = arith.addf %4, %9 : vector<32x8xf32>
    %c0_13 = arith.constant 0 : index
    %c2 = arith.constant 2 : index
    %c0_14 = arith.constant 0 : index
    %c0_15 = arith.constant 0 : index
    %11 = vector.load %arg1[%c0_13, %c2, %c0_14, %c0_15] : memref<1x8x40x3xbf16, #tpu.memory_space<vmem>>, vector<1x1x32x3xbf16>
    %12 = vector.shape_cast %11 : vector<1x1x32x3xbf16> to vector<32x3xbf16>
    %c2_16 = arith.constant 2 : index
    %c0_17 = arith.constant 0 : index
    %c0_18 = arith.constant 0 : index
    %13 = vector.load %arg2[%c2_16, %c0_17, %c0_18] : memref<16x3x8xbf16, #tpu.memory_space<vmem>>, vector<1x3x8xbf16>
    %14 = vector.shape_cast %13 : vector<1x3x8xbf16> to vector<3x8xbf16>
    %cst_19 = arith.constant dense<0.000000e+00> : vector<32x8xf32>
    %15 = tpu.matmul %12, %14, %cst_19 {dimension_numbers = #tpu.dot_dimension_numbers<[1], [0], [0], [1], [0, 0, 1, 1], [], []>} : vector<32x3xbf16>, vector<3x8xbf16>, vector<32x8xf32> -> vector<32x8xf32>
    %16 = arith.addf %10, %15 : vector<32x8xf32>
    %c0_20 = arith.constant 0 : index
    %c3 = arith.constant 3 : index
    %c0_21 = arith.constant 0 : index
    %c0_22 = arith.constant 0 : index
    %17 = vector.load %arg1[%c0_20, %c3, %c0_21, %c0_22] : memref<1x8x40x3xbf16, #tpu.memory_space<vmem>>, vector<1x1x32x3xbf16>
    %18 = vector.shape_cast %17 : vector<1x1x32x3xbf16> to vector<32x3xbf16>
    %c3_23 = arith.constant 3 : index
    %c0_24 = arith.constant 0 : index
    %c0_25 = arith.constant 0 : index
    %19 = vector.load %arg2[%c3_23, %c0_24, %c0_25] : memref<16x3x8xbf16, #tpu.memory_space<vmem>>, vector<1x3x8xbf16>
    %20 = vector.shape_cast %19 : vector<1x3x8xbf16> to vector<3x8xbf16>
    %cst_26 = arith.constant dense<0.000000e+00> : vector<32x8xf32>
    %21 = tpu.matmul %18, %20, %cst_26 {dimension_numbers = #tpu.dot_dimension_numbers<[1], [0], [0], [1], [0, 0, 1, 1], [], []>} : vector<32x3xbf16>, vector<3x8xbf16>, vector<32x8xf32> -> vector<32x8xf32>
    %22 = arith.addf %16, %21 : vector<32x8xf32>
    %c0_27 = arith.constant 0 : index
    %c4 = arith.constant 4 : index
    %c0_28 = arith.constant 0 : index
    %c0_29 = arith.constant 0 : index
    %23 = vector.load %arg1[%c0_27, %c4, %c0_28, %c0_29] : memref<1x8x40x3xbf16, #tpu.memory_space<vmem>>, vector<1x1x32x3xbf16>
    %24 = vector.shape_cast %23 : vector<1x1x32x3xbf16> to vector<32x3xbf16>
    %c4_30 = arith.constant 4 : index
    %c0_31 = arith.constant 0 : index
    %c0_32 = arith.constant 0 : index
    %25 = vector.load %arg2[%c4_30, %c0_31, %c0_32] : memref<16x3x8xbf16, #tpu.memory_space<vmem>>, vector<1x3x8xbf16>
    %26 = vector.shape_cast %25 : vector<1x3x8xbf16> to vector<3x8xbf16>
    %cst_33 = arith.constant dense<0.000000e+00> : vector<32x8xf32>
    %27 = tpu.matmul %24, %26, %cst_33 {dimension_numbers = #tpu.dot_dimension_numbers<[1], [0], [0], [1], [0, 0, 1, 1], [], []>} : vector<32x3xbf16>, vector<3x8xbf16>, vector<32x8xf32> -> vector<32x8xf32>
    %28 = arith.addf %22, %27 : vector<32x8xf32>
    %c0_34 = arith.constant 0 : index
    %c5 = arith.constant 5 : index
    %c0_35 = arith.constant 0 : index
    %c0_36 = arith.constant 0 : index
    %29 = vector.load %arg1[%c0_34, %c5, %c0_35, %c0_36] : memref<1x8x40x3xbf16, #tpu.memory_space<vmem>>, vector<1x1x32x3xbf16>
    %30 = vector.shape_cast %29 : vector<1x1x32x3xbf16> to vector<32x3xbf16>
    %c5_37 = arith.constant 5 : index
    %c0_38 = arith.constant 0 : index
    %c0_39 = arith.constant 0 : index
    %31 = vector.load %arg2[%c5_37, %c0_38, %c0_39] : memref<16x3x8xbf16, #tpu.memory_space<vmem>>, vector<1x3x8xbf16>
    %32 = vector.shape_cast %31 : vector<1x3x8xbf16> to vector<3x8xbf16>
    %cst_40 = arith.constant dense<0.000000e+00> : vector<32x8xf32>
    %33 = tpu.matmul %30, %32, %cst_40 {dimension_numbers = #tpu.dot_dimension_numbers<[1], [0], [0], [1], [0, 0, 1, 1], [], []>} : vector<32x3xbf16>, vector<3x8xbf16>, vector<32x8xf32> -> vector<32x8xf32>
    %34 = arith.addf %28, %33 : vector<32x8xf32>
    %c0_41 = arith.constant 0 : index
    %c6 = arith.constant 6 : index
    %c0_42 = arith.constant 0 : index
    %c0_43 = arith.constant 0 : index
    %35 = vector.load %arg1[%c0_41, %c6, %c0_42, %c0_43] : memref<1x8x40x3xbf16, #tpu.memory_space<vmem>>, vector<1x1x32x3xbf16>
    %36 = vector.shape_cast %35 : vector<1x1x32x3xbf16> to vector<32x3xbf16>
    %c6_44 = arith.constant 6 : index
    %c0_45 = arith.constant 0 : index
    %c0_46 = arith.constant 0 : index
    %37 = vector.load %arg2[%c6_44, %c0_45, %c0_46] : memref<16x3x8xbf16, #tpu.memory_space<vmem>>, vector<1x3x8xbf16>
    %38 = vector.shape_cast %37 : vector<1x3x8xbf16> to vector<3x8xbf16>
    %cst_47 = arith.constant dense<0.000000e+00> : vector<32x8xf32>
    %39 = tpu.matmul %36, %38, %cst_47 {dimension_numbers = #tpu.dot_dimension_numbers<[1], [0], [0], [1], [0, 0, 1, 1], [], []>} : vector<32x3xbf16>, vector<3x8xbf16>, vector<32x8xf32> -> vector<32x8xf32>
    %40 = arith.addf %34, %39 : vector<32x8xf32>
    %c0_48 = arith.constant 0 : index
    %c7 = arith.constant 7 : index
    %c0_49 = arith.constant 0 : index
    %c0_50 = arith.constant 0 : index
    %41 = vector.load %arg1[%c0_48, %c7, %c0_49, %c0_50] : memref<1x8x40x3xbf16, #tpu.memory_space<vmem>>, vector<1x1x32x3xbf16>
    %42 = vector.shape_cast %41 : vector<1x1x32x3xbf16> to vector<32x3xbf16>
    %c7_51 = arith.constant 7 : index
    %c0_52 = arith.constant 0 : index
    %c0_53 = arith.constant 0 : index
    %43 = vector.load %arg2[%c7_51, %c0_52, %c0_53] : memref<16x3x8xbf16, #tpu.memory_space<vmem>>, vector<1x3x8xbf16>
    %44 = vector.shape_cast %43 : vector<1x3x8xbf16> to vector<3x8xbf16>
    %cst_54 = arith.constant dense<0.000000e+00> : vector<32x8xf32>
    %45 = tpu.matmul %42, %44, %cst_54 {dimension_numbers = #tpu.dot_dimension_numbers<[1], [0], [0], [1], [0, 0, 1, 1], [], []>} : vector<32x3xbf16>, vector<3x8xbf16>, vector<32x8xf32> -> vector<32x8xf32>
    %46 = arith.addf %40, %45 : vector<32x8xf32>
    %c0_55 = arith.constant 0 : index
    %c0_56 = arith.constant 0 : index
    %c8 = arith.constant 8 : index
    %c0_57 = arith.constant 0 : index
    %47 = vector.load %arg1[%c0_55, %c0_56, %c8, %c0_57] : memref<1x8x40x3xbf16, #tpu.memory_space<vmem>>, vector<1x1x32x3xbf16>
    %48 = vector.shape_cast %47 : vector<1x1x32x3xbf16> to vector<32x3xbf16>
    %c8_58 = arith.constant 8 : index
    %c0_59 = arith.constant 0 : index
    %c0_60 = arith.constant 0 : index
    %49 = vector.load %arg2[%c8_58, %c0_59, %c0_60] : memref<16x3x8xbf16, #tpu.memory_space<vmem>>, vector<1x3x8xbf16>
    %50 = vector.shape_cast %49 : vector<1x3x8xbf16> to vector<3x8xbf16>
    %cst_61 = arith.constant dense<0.000000e+00> : vector<32x8xf32>
    %51 = tpu.matmul %48, %50, %cst_61 {dimension_numbers = #tpu.dot_dimension_numbers<[1], [0], [0], [1], [0, 0, 1, 1], [], []>} : vector<32x3xbf16>, vector<3x8xbf16>, vector<32x8xf32> -> vector<32x8xf32>
    %52 = arith.addf %46, %51 : vector<32x8xf32>
    %c0_62 = arith.constant 0 : index
    %c1_63 = arith.constant 1 : index
    %c8_64 = arith.constant 8 : index
    %c0_65 = arith.constant 0 : index
    %53 = vector.load %arg1[%c0_62, %c1_63, %c8_64, %c0_65] : memref<1x8x40x3xbf16, #tpu.memory_space<vmem>>, vector<1x1x32x3xbf16>
    %54 = vector.shape_cast %53 : vector<1x1x32x3xbf16> to vector<32x3xbf16>
    %c9 = arith.constant 9 : index
    %c0_66 = arith.constant 0 : index
    %c0_67 = arith.constant 0 : index
    %55 = vector.load %arg2[%c9, %c0_66, %c0_67] : memref<16x3x8xbf16, #tpu.memory_space<vmem>>, vector<1x3x8xbf16>
    %56 = vector.shape_cast %55 : vector<1x3x8xbf16> to vector<3x8xbf16>
    %cst_68 = arith.constant dense<0.000000e+00> : vector<32x8xf32>
    %57 = tpu.matmul %54, %56, %cst_68 {dimension_numbers = #tpu.dot_dimension_numbers<[1], [0], [0], [1], [0, 0, 1, 1], [], []>} : vector<32x3xbf16>, vector<3x8xbf16>, vector<32x8xf32> -> vector<32x8xf32>
    %58 = arith.addf %52, %57 : vector<32x8xf32>
    %c0_69 = arith.constant 0 : index
    %c2_70 = arith.constant 2 : index
    %c8_71 = arith.constant 8 : index
    %c0_72 = arith.constant 0 : index
    %59 = vector.load %arg1[%c0_69, %c2_70, %c8_71, %c0_72] : memref<1x8x40x3xbf16, #tpu.memory_space<vmem>>, vector<1x1x32x3xbf16>
    %60 = vector.shape_cast %59 : vector<1x1x32x3xbf16> to vector<32x3xbf16>
    %c10 = arith.constant 10 : index
    %c0_73 = arith.constant 0 : index
    %c0_74 = arith.constant 0 : index
    %61 = vector.load %arg2[%c10, %c0_73, %c0_74] : memref<16x3x8xbf16, #tpu.memory_space<vmem>>, vector<1x3x8xbf16>
    %62 = vector.shape_cast %61 : vector<1x3x8xbf16> to vector<3x8xbf16>
    %cst_75 = arith.constant dense<0.000000e+00> : vector<32x8xf32>
    %63 = tpu.matmul %60, %62, %cst_75 {dimension_numbers = #tpu.dot_dimension_numbers<[1], [0], [0], [1], [0, 0, 1, 1], [], []>} : vector<32x3xbf16>, vector<3x8xbf16>, vector<32x8xf32> -> vector<32x8xf32>
    %64 = arith.addf %58, %63 : vector<32x8xf32>
    %c0_76 = arith.constant 0 : index
    %c3_77 = arith.constant 3 : index
    %c8_78 = arith.constant 8 : index
    %c0_79 = arith.constant 0 : index
    %65 = vector.load %arg1[%c0_76, %c3_77, %c8_78, %c0_79] : memref<1x8x40x3xbf16, #tpu.memory_space<vmem>>, vector<1x1x32x3xbf16>
    %66 = vector.shape_cast %65 : vector<1x1x32x3xbf16> to vector<32x3xbf16>
    %c11 = arith.constant 11 : index
    %c0_80 = arith.constant 0 : index
    %c0_81 = arith.constant 0 : index
    %67 = vector.load %arg2[%c11, %c0_80, %c0_81] : memref<16x3x8xbf16, #tpu.memory_space<vmem>>, vector<1x3x8xbf16>
    %68 = vector.shape_cast %67 : vector<1x3x8xbf16> to vector<3x8xbf16>
    %cst_82 = arith.constant dense<0.000000e+00> : vector<32x8xf32>
    %69 = tpu.matmul %66, %68, %cst_82 {dimension_numbers = #tpu.dot_dimension_numbers<[1], [0], [0], [1], [0, 0, 1, 1], [], []>} : vector<32x3xbf16>, vector<3x8xbf16>, vector<32x8xf32> -> vector<32x8xf32>
    %70 = arith.addf %64, %69 : vector<32x8xf32>
    %c0_83 = arith.constant 0 : index
    %c4_84 = arith.constant 4 : index
    %c8_85 = arith.constant 8 : index
    %c0_86 = arith.constant 0 : index
    %71 = vector.load %arg1[%c0_83, %c4_84, %c8_85, %c0_86] : memref<1x8x40x3xbf16, #tpu.memory_space<vmem>>, vector<1x1x32x3xbf16>
    %72 = vector.shape_cast %71 : vector<1x1x32x3xbf16> to vector<32x3xbf16>
    %c12 = arith.constant 12 : index
    %c0_87 = arith.constant 0 : index
    %c0_88 = arith.constant 0 : index
    %73 = vector.load %arg2[%c12, %c0_87, %c0_88] : memref<16x3x8xbf16, #tpu.memory_space<vmem>>, vector<1x3x8xbf16>
    %74 = vector.shape_cast %73 : vector<1x3x8xbf16> to vector<3x8xbf16>
    %cst_89 = arith.constant dense<0.000000e+00> : vector<32x8xf32>
    %75 = tpu.matmul %72, %74, %cst_89 {dimension_numbers = #tpu.dot_dimension_numbers<[1], [0], [0], [1], [0, 0, 1, 1], [], []>} : vector<32x3xbf16>, vector<3x8xbf16>, vector<32x8xf32> -> vector<32x8xf32>
    %76 = arith.addf %70, %75 : vector<32x8xf32>
    %c0_90 = arith.constant 0 : index
    %c5_91 = arith.constant 5 : index
    %c8_92 = arith.constant 8 : index
    %c0_93 = arith.constant 0 : index
    %77 = vector.load %arg1[%c0_90, %c5_91, %c8_92, %c0_93] : memref<1x8x40x3xbf16, #tpu.memory_space<vmem>>, vector<1x1x32x3xbf16>
    %78 = vector.shape_cast %77 : vector<1x1x32x3xbf16> to vector<32x3xbf16>
    %c13 = arith.constant 13 : index
    %c0_94 = arith.constant 0 : index
    %c0_95 = arith.constant 0 : index
    %79 = vector.load %arg2[%c13, %c0_94, %c0_95] : memref<16x3x8xbf16, #tpu.memory_space<vmem>>, vector<1x3x8xbf16>
    %80 = vector.shape_cast %79 : vector<1x3x8xbf16> to vector<3x8xbf16>
    %cst_96 = arith.constant dense<0.000000e+00> : vector<32x8xf32>
    %81 = tpu.matmul %78, %80, %cst_96 {dimension_numbers = #tpu.dot_dimension_numbers<[1], [0], [0], [1], [0, 0, 1, 1], [], []>} : vector<32x3xbf16>, vector<3x8xbf16>, vector<32x8xf32> -> vector<32x8xf32>
    %82 = arith.addf %76, %81 : vector<32x8xf32>
    %c0_97 = arith.constant 0 : index
    %c6_98 = arith.constant 6 : index
    %c8_99 = arith.constant 8 : index
    %c0_100 = arith.constant 0 : index
    %83 = vector.load %arg1[%c0_97, %c6_98, %c8_99, %c0_100] : memref<1x8x40x3xbf16, #tpu.memory_space<vmem>>, vector<1x1x32x3xbf16>
    %84 = vector.shape_cast %83 : vector<1x1x32x3xbf16> to vector<32x3xbf16>
    %c14 = arith.constant 14 : index
    %c0_101 = arith.constant 0 : index
    %c0_102 = arith.constant 0 : index
    %85 = vector.load %arg2[%c14, %c0_101, %c0_102] : memref<16x3x8xbf16, #tpu.memory_space<vmem>>, vector<1x3x8xbf16>
    %86 = vector.shape_cast %85 : vector<1x3x8xbf16> to vector<3x8xbf16>
    %cst_103 = arith.constant dense<0.000000e+00> : vector<32x8xf32>
    %87 = tpu.matmul %84, %86, %cst_103 {dimension_numbers = #tpu.dot_dimension_numbers<[1], [0], [0], [1], [0, 0, 1, 1], [], []>} : vector<32x3xbf16>, vector<3x8xbf16>, vector<32x8xf32> -> vector<32x8xf32>
    %88 = arith.addf %82, %87 : vector<32x8xf32>
    %c0_104 = arith.constant 0 : index
    %c7_105 = arith.constant 7 : index
    %c8_106 = arith.constant 8 : index
    %c0_107 = arith.constant 0 : index
    %89 = vector.load %arg1[%c0_104, %c7_105, %c8_106, %c0_107] : memref<1x8x40x3xbf16, #tpu.memory_space<vmem>>, vector<1x1x32x3xbf16>
    %90 = vector.shape_cast %89 : vector<1x1x32x3xbf16> to vector<32x3xbf16>
    %c15 = arith.constant 15 : index
    %c0_108 = arith.constant 0 : index
    %c0_109 = arith.constant 0 : index
    %91 = vector.load %arg2[%c15, %c0_108, %c0_109] : memref<16x3x8xbf16, #tpu.memory_space<vmem>>, vector<1x3x8xbf16>
    %92 = vector.shape_cast %91 : vector<1x3x8xbf16> to vector<3x8xbf16>
    %cst_110 = arith.constant dense<0.000000e+00> : vector<32x8xf32>
    %93 = tpu.matmul %90, %92, %cst_110 {dimension_numbers = #tpu.dot_dimension_numbers<[1], [0], [0], [1], [0, 0, 1, 1], [], []>} : vector<32x3xbf16>, vector<3x8xbf16>, vector<32x8xf32> -> vector<32x8xf32>
    %94 = arith.addf %88, %93 : vector<32x8xf32>
    %95 = arith.truncf %94 : vector<32x8xf32> to vector<32x8xbf16>
    %c0_111 = arith.constant 0 : index
    %c0_112 = arith.constant 0 : index
    %c0_113 = arith.constant 0 : index
    %c0_114 = arith.constant 0 : index
    %96 = vector.load %arg3[%c0_111, %c0_112, %c0_113, %c0_114] : memref<1x1x32x8xbf16, #tpu.memory_space<vmem>>, vector<1x1x32x8xbf16>
    %97 = vector.shape_cast %96 : vector<1x1x32x8xbf16> to vector<32x8xbf16>
    %98 = vector.shape_cast %95 : vector<32x8xbf16> to vector<1x1x32x8xbf16>
    tpu.vector_store %arg3[%c0_111, %c0_112, %c0_113, %c0_114], %98 {strides = array<i32>} : memref<1x1x32x8xbf16, #tpu.memory_space<vmem>>, vector<1x1x32x8xbf16>,
    return
  }
  func.func @transform_0(%arg0: i32) -> (i32, i32, i32, i32) {
    %c0_i32 = arith.constant 0 : i32
    %c0_i32_0 = arith.constant 0 : i32
    %c0_i32_1 = arith.constant 0 : i32
    %c0_i32_2 = arith.constant 0 : i32
    return %arg0, %c0_i32, %c0_i32_0, %c0_i32_1 : i32, i32, i32, i32
  }
  func.func @transform_1(%arg0: i32) -> (i32, i32, i32) {
    %c0_i32 = arith.constant 0 : i32
    %c0_i32_0 = arith.constant 0 : i32
    %c0_i32_1 = arith.constant 0 : i32
    %c0_i32_2 = arith.constant 0 : i32
    return %c0_i32, %c0_i32_0, %c0_i32_1 : i32, i32, i32
  }
  func.func @transform_2(%arg0: i32) -> (i32, i32, i32, i32) {
    %c0_i32 = arith.constant 0 : i32
    %c0_i32_0 = arith.constant 0 : i32
    %c0_i32_1 = arith.constant 0 : i32
    %c0_i32_2 = arith.constant 0 : i32
    return %arg0, %c0_i32, %c0_i32_0, %c0_i32_1 : i32, i32, i32, i32
  }
}

</mosaic_0001>

<llo_original>
// kernel: tpu_custom_call.1
$region0: #{tpu_custom_call.1}
  #allocation0 [shape = 'u32[]', space=smem, size = 0x4, offset = 0x4, fixed_abs, tag = 'smem constant byte address 0x4 - core index']
  #allocation1 [shape = 'u32[72,128]{1,0:T(1,128)}', space=vmem, size = 0x9000, scoped, tag = 'internal scratch']
  %s0 = inlined_call_operand.vmem [shape: bf16[2,8,40,3], index: 0, kind: input, shape index: {}]
  %s1 = inlined_call_operand.vmem [shape: bf16[16,3,8], index: 1, kind: input, shape index: {}]
  %s2 = inlined_call_operand.vmem [shape: bf16[2,1,32,8], index: 2, kind: output, shape index: {}]
  %s3 = sld [smem:[#allocation0]]
  $region41: #{tpu_custom_call.1} parent=0
    _
  %s5 = ssub.s32 1, %s3
  %s6 = scalar_select 0, %s5, %s3
  loop: start=0, step=1, limit=4
  $region2: #{tpu_custom_call.1} parent=0 // loop_pre_header
    _
  $region3: #{tpu_custom_call.1} parent=0 // loop_header
    %s8 = sphi 0, %s12
    %p9 = scmp.ge.s32.totalorder %s8, 4
    %s18 = sphi 0, %s20
    %s21 = sphi 0, %s18
    %s22 = sphi 0, %s21
    %s38 = sphi 0, %s22
    %s42 = sphi 0, %s42
    %s44 = sphi 0, %s42
    %s45 = sphi 0, %s44
    %s59 = sphi 0, %s45
    %s65 = sphi 0, %s67
    %s68 = sphi 0, %s65
    %s69 = sphi 0, %s68
    %s85 = sphi 0, %s69
  $region4: #{tpu_custom_call.1} parent=0 // loop_header_branch
    %11 = sbr.rel (%p9) target = $region8
  $region5: #{tpu_custom_call.1} parent=0 // loop_body
    %s13 = ssub.s32 %s8, 1
    %s14 = ssub.s32 %s8, 2
    %s15 = sadd.s32 %s8, 1
    %s16 = ssub.s32 %s8, %s15
    %p17 = scmp.eq.s32.totalorder %s16, 0
    %s19 = sadd.s32 %s18, 1
    %s20 = scalar_select %p17, %s18, %s19
    %p23 = pneg %p17
    %p24 = scmp.eq.s32.totalorder %s8, 1
    %p25 = por %p23, %p24
    %p26 = scmp.ne.s32.totalorder %s18, %s21
    %p27 = scmp.eq.s32.totalorder %s8, 0
    %p28 = por %p26, %p27
    %p29 = scmp.ne.s32.totalorder %s18, %s21
    %p30 = scmp.eq.s32.totalorder %s13, 1
    %p31 = por %p29, %p30
    %p32 = scmp.ne.s32.totalorder %s21, %s22
    %p33 = scmp.eq.s32.totalorder %s13, 0
    %p34 = por %p32, %p33
    %p35 = scmp.ne.s32.totalorder %s21, %s22
    %p36 = scmp.eq.s32.totalorder %s14, 1
    %p37 = por %p35, %p36
    %p39 = scmp.ne.s32.totalorder %s22, %s38
    %p40 = scmp.eq.s32.totalorder %s14, 0
    %p41 = por %p39, %p40
    %s43 = sadd.s32 %s42, 1
    %p46 = scmp.eq.s32.totalorder %s8, 1
    %p47 = scmp.ne.s32.totalorder %s42, %s44
    %p48 = scmp.eq.s32.totalorder %s8, 0
    %p49 = por %p47, %p48
    %p50 = scmp.ne.s32.totalorder %s42, %s44
    %p51 = scmp.eq.s32.totalorder %s13, 1
    %p52 = por %p50, %p51
    %p53 = scmp.ne.s32.totalorder %s44, %s45
    %p54 = scmp.eq.s32.totalorder %s13, 0
    %p55 = por %p53, %p54
    %p56 = scmp.ne.s32.totalorder %s44, %s45
    %p57 = scmp.eq.s32.totalorder %s14, 1
    %p58 = por %p56, %p57
    %p60 = scmp.ne.s32.totalorder %s45, %s59
    %p61 = scmp.eq.s32.totalorder %s14, 0
    %p62 = por %p60, %p61
    %s63 = ssub.s32 %s8, %s15
    %p64 = scmp.eq.s32.totalorder %s63, 0
    %s66 = sadd.s32 %s65, 1
    %s67 = scalar_select %p64, %s65, %s66
    %p70 = pneg %p64
    %p71 = scmp.eq.s32.totalorder %s8, 1
    %p72 = por %p70, %p71
    %p73 = scmp.ne.s32.totalorder %s65, %s68
    %p74 = scmp.eq.s32.totalorder %s8, 0
    %p75 = por %p73, %p74
    %p76 = scmp.ne.s32.totalorder %s65, %s68
    %p77 = scmp.eq.s32.totalorder %s13, 1
    %p78 = por %p76, %p77
    %p79 = scmp.ne.s32.totalorder %s68, %s69
    %p80 = scmp.eq.s32.totalorder %s13, 0
    %p81 = por %p79, %p80
    %p82 = scmp.ne.s32.totalorder %s68, %s69
    %p83 = scmp.eq.s32.totalorder %s14, 1
    %p84 = por %p82, %p83
    %p86 = scmp.ne.s32.totalorder %s69, %s85
    %p87 = scmp.eq.s32.totalorder %s14, 0
    %p88 = por %p86, %p87
    %p89 = scmp.le.s32.totalorder 1, %s8
    %p90 = scmp.lt.s32.totalorder %s8, 3
    %p91 = pnand %p89, %p90
    %p92 = pneg %p91
    // Predicated region
    $region9: #{tpu_custom_call.1} parent=5 // pred_check
      _
    $region10: #{tpu_custom_call.1} parent=5 // pred_check_branch
      %94 = sbr.rel (%p91) target = $region12
    $region11: #{tpu_custom_call.1} parent=5 // pred_region
      %s95 = ssub.s32 %s8, 1
      // Predicated region
      $region13: #{tpu_custom_call.1} parent=11 // pred_check
        %p96 = pneg %p55
      $region14: #{tpu_custom_call.1} parent=11 // pred_check_branch
        %98 = sbr.rel (%p96) target = $region16
      $region15: #{tpu_custom_call.1} parent=11 // pred_region
        _
      $region16: #{tpu_custom_call.1} parent=11 // pred_fallthru
        _
    $region12: #{tpu_custom_call.1} parent=5 // pred_fallthru
      _
    %p99 = scmp.lt.s32.totalorder %s8, 2
    // Predicated region
    $region17: #{tpu_custom_call.1} parent=5 // pred_check
      %p100 = pneg %p99
    $region18: #{tpu_custom_call.1} parent=5 // pred_check_branch
      %102 = sbr.rel (%p100) target = $region20
    $region19: #{tpu_custom_call.1} parent=5 // pred_region
      // Predicated region
      $region21: #{tpu_custom_call.1} parent=19 // pred_check
        %p103 = pneg %p28
      $region22: #{tpu_custom_call.1} parent=19 // pred_check_branch
        %105 = sbr.rel (%p103) target = $region24
      $region23: #{tpu_custom_call.1} parent=19 // pred_region
        %p106 = scmp.lt.s32.totalorder %s8, 1
        %s107 = scalar_select %p106, %s8, 1
        %s108 = smul.addr %s107, 40
        %s109 = smul.addr %s108, 4
        %s110 = scalar_lea.vmem %s0, %s109
      $region24: #{tpu_custom_call.1} parent=19 // pred_fallthru
        _
    $region20: #{tpu_custom_call.1} parent=5 // pred_fallthru
      _
    %p111 = scmp.le.s32.totalorder 1, %s8
    %p112 = scmp.lt.s32.totalorder %s8, 3
    %p113 = pnand %p111, %p112
    %p114 = pneg %p113
    // Predicated region
    $region25: #{tpu_custom_call.1} parent=5 // pred_check
      _
    $region26: #{tpu_custom_call.1} parent=5 // pred_check_branch
      %116 = sbr.rel (%p113) target = $region28
    $region27: #{tpu_custom_call.1} parent=5 // pred_region
      %s117 = ssub.s32 %s8, 1
      %p118 = scmp.lt.s32.totalorder %s13, 1
      %s119 = scalar_select %p118, %s13, 1
      %s120 = smul.addr %s119, 40
      %s121 = smul.addr %s120, 4
      %s122 = scalar_lea.vmem %s0, %s121
      %p123 = pneg %p34
      %p124 = pneg %p31
      %p125 = pneg %p55
      %p126 = pneg %p52
      %p127 = pneg %p81
      %p128 = pneg %p78
      %p129 = scmp.lt.s32.totalorder %s13, 1
      %s130 = scalar_select %p129, %s13, 1
      %s131 = smul.addr %s130, 4
      %s132 = smul.addr %s131, 4
      %s133 = scalar_lea.vmem %s2, %s132
      %p134 = scmp.lt.s32.totalorder %s13, 1
      %s135 = scalar_select %p134, %s13, 1
      %s136 = smul.addr %s135, 40
      %s137 = smul.addr %s136, 4
      %s138 = scalar_lea.vmem %s0, %s137
      %p139 = scmp.lt.s32.totalorder %s13, 1
      %s140 = scalar_select %p139, %s13, 1
      %s141 = smul.addr %s140, 4
      %s142 = smul.addr %s141, 4
      %s143 = scalar_lea.vmem %s2, %s142
      %v145 = vld [vmem:[%s138] sm:$0xf]
      %v146 = vld [vmem:[%s138 + $0x4] sm:$0xf]
      %v147 = vld [vmem:[%s138 + $0x8] sm:$0xf]
      %v148 = vld [vmem:[%s138 + $0xc] sm:$0xf]
      %v149 = vld [vmem:[%s1] sm:$0x3]
      %s150 = scalar_lea.vmem %s138, 20
      %v151 = vld [vmem:[%s150] sm:$0xf]
      %v152 = vld [vmem:[%s150 + $0x4] sm:$0xf]
      %v153 = vld [vmem:[%s150 + $0x8] sm:$0xf]
      %v154 = vld [vmem:[%s150 + $0xc] sm:$0xf]
      %s155 = scalar_lea.vmem %s1, 2
      %v156 = vld [vmem:[%s155] sm:$0x3]
      %v161 = vunpack.c.l.b16 %v151
      %v162 = vunpack.c.l.b16 %v152
      %v163 = vunpack.c.l.b16 %v153
      %v164 = vunpack.c.l.b16 %v154
      %v165 = vpack.c.b16 %v162, %v161
      %v166 = vpack.c.b16 %v164, %v163
      %vm167 = vcmask 23552
      %v169 = vsel %vm167, %v165, 0
      %v172 = vsel %vm167, %v166, 0
      %vm174 = vcmask 1040384
      %vm175 = vcmask 1041408
      %v176 = vsel %vm174, 4294967295, 65535
      %v177 = vsel %vm175, %v176, 0
      %v179 = vand.u32 %v156, %v177
      %181 = vmatpush.bf16.msra.mxu0 0
      %182 = vmatpush.bf16.msra.mxu0 0
      %183 = vmatpush.bf16.msra.mxu0 0
      %184 = vmatpush.bf16.msra.mxu0 0
      %185 = vmatpush.bf16.msra.mxu0 0
      %186 = vmatpush.bf16.msra.mxu0 0
      %187 = vmatpush.bf16.msra.mxu0 0
      %188 = vmatpush.bf16.msra.mxu0 %v179
      %189 = vmatmul.bf16.gmra.mxu0 %v169
      %v190 = vpop.f32.mrf.mxu0
      %v191 = vadd.f32 0.0, %v190
      %v192 = vpop.f32.mrf.mxu0
      %v193 = vadd.f32 0.0, %v192
      %194 = vmatmul.bf16.gmra.mxu0 %v172
      %v195 = vpop.f32.mrf.mxu0
      %v196 = vadd.f32 0.0, %v195
      %v197 = vpop.f32.mrf.mxu0
      %v198 = vadd.f32 0.0, %v197
      %199 = vdwg.mxu0
      %v204 = vunpack.c.l.b16 %v145
      %v205 = vunpack.c.l.b16 %v146
      %v206 = vunpack.c.l.b16 %v147
      %v207 = vunpack.c.l.b16 %v148
      %v208 = vpack.c.b16 %v205, %v204
      %v209 = vpack.c.b16 %v207, %v206
      %v211 = vsel %vm167, %v208, 0
      %v214 = vsel %vm167, %v209, 0
      %v217 = vand.u32 %v149, %v177
      %219 = vmatpush.bf16.msra.mxu0 0
      %220 = vmatpush.bf16.msra.mxu0 0
      %221 = vmatpush.bf16.msra.mxu0 0
      %222 = vmatpush.bf16.msra.mxu0 0
      %223 = vmatpush.bf16.msra.mxu0 0
      %224 = vmatpush.bf16.msra.mxu0 0
      %225 = vmatpush.bf16.msra.mxu0 0
      %226 = vmatpush.bf16.msra.mxu0 %v217
      %227 = vmatmul.bf16.gmra.mxu0 %v211
      %v228 = vpop.f32.mrf.mxu0
      %v229 = vadd.f32 %v191, %v228
      %v230 = vpop.f32.mrf.mxu0
      %v231 = vadd.f32 %v193, %v230
      %232 = vmatmul.bf16.gmra.mxu0 %v214
      %v233 = vpop.f32.mrf.mxu0
      %v234 = vadd.f32 %v196, %v233
      %v235 = vpop.f32.mrf.mxu0
      %v236 = vadd.f32 %v198, %v235
      %237 = vdwg.mxu0
      %s238 = scalar_lea.vmem %s138, 40
      %v239 = vld [vmem:[%s238] sm:$0xf]
      %v240 = vld [vmem:[%s238 + $0x4] sm:$0xf]
      %v241 = vld [vmem:[%s238 + $0x8] sm:$0xf]
      %v242 = vld [vmem:[%s238 + $0xc] sm:$0xf]
      %s243 = scalar_lea.vmem %s1, 4
      %v244 = vld [vmem:[%s243] sm:$0x3]
      %v249 = vunpack.c.l.b16 %v239
      %v250 = vunpack.c.l.b16 %v240
      %v251 = vunpack.c.l.b16 %v241
      %v252 = vunpack.c.l.b16 %v242
      %v253 = vpack.c.b16 %v250, %v249
      %v254 = vpack.c.b16 %v252, %v251
      %v256 = vsel %vm167, %v253, 0
      %v259 = vsel %vm167, %v254, 0
      %v262 = vand.u32 %v244, %v177
      %264 = vmatpush.bf16.msra.mxu0 0
      %265 = vmatpush.bf16.msra.mxu0 0
      %266 = vmatpush.bf16.msra.mxu0 0
      %267 = vmatpush.bf16.msra.mxu0 0
      %268 = vmatpush.bf16.msra.mxu0 0
      %269 = vmatpush.bf16.msra.mxu0 0
      %270 = vmatpush.bf16.msra.mxu0 0
      %271 = vmatpush.bf16.msra.mxu0 %v262
      %272 = vmatmul.bf16.gmra.mxu0 %v256
      %v273 = vpop.f32.mrf.mxu0
      %v274 = vadd.f32 0.0, %v273
      %v275 = vpop.f32.mrf.mxu0
      %v276 = vadd.f32 0.0, %v275
      %277 = vmatmul.bf16.gmra.mxu0 %v259
      %v278 = vpop.f32.mrf.mxu0
      %v279 = vadd.f32 0.0, %v278
      %v280 = vpop.f32.mrf.mxu0
      %v281 = vadd.f32 0.0, %v280
      %282 = vdwg.mxu0
      %v283 = vadd.f32 %v229, %v274
      %v284 = vadd.f32 %v231, %v276
      %v285 = vadd.f32 %v234, %v279
      %v286 = vadd.f32 %v236, %v281
      %s287 = scalar_lea.vmem %s138, 60
      %v288 = vld [vmem:[%s287] sm:$0xf]
      %v289 = vld [vmem:[%s287 + $0x4] sm:$0xf]
      %v290 = vld [vmem:[%s287 + $0x8] sm:$0xf]
      %v291 = vld [vmem:[%s287 + $0xc] sm:$0xf]
      %s292 = scalar_lea.vmem %s1, 6
      %v293 = vld [vmem:[%s292] sm:$0x3]
      %v298 = vunpack.c.l.b16 %v288
      %v299 = vunpack.c.l.b16 %v289
      %v300 = vunpack.c.l.b16 %v290
      %v301 = vunpack.c.l.b16 %v291
      %v302 = vpack.c.b16 %v299, %v298
      %v303 = vpack.c.b16 %v301, %v300
      %v305 = vsel %vm167, %v302, 0
      %v308 = vsel %vm167, %v303, 0
      %v311 = vand.u32 %v293, %v177
      %313 = vmatpush.bf16.msra.mxu0 0
      %314 = vmatpush.bf16.msra.mxu0 0
      %315 = vmatpush.bf16.msra.mxu0 0
      %316 = vmatpush.bf16.msra.mxu0 0
      %317 = vmatpush.bf16.msra.mxu0 0
      %318 = vmatpush.bf16.msra.mxu0 0
      %319 = vmatpush.bf16.msra.mxu0 0
      %320 = vmatpush.bf16.msra.mxu0 %v311
      %321 = vmatmul.bf16.gmra.mxu0 %v305
      %v322 = vpop.f32.mrf.mxu0
      %v323 = vadd.f32 0.0, %v322
      %v324 = vpop.f32.mrf.mxu0
      %v325 = vadd.f32 0.0, %v324
      %326 = vmatmul.bf16.gmra.mxu0 %v308
      %v327 = vpop.f32.mrf.mxu0
      %v328 = vadd.f32 0.0, %v327
      %v329 = vpop.f32.mrf.mxu0
      %v330 = vadd.f32 0.0, %v329
      %331 = vdwg.mxu0
      %v332 = vadd.f32 %v283, %v323
      %v333 = vadd.f32 %v284, %v325
      %v334 = vadd.f32 %v285, %v328
      %v335 = vadd.f32 %v286, %v330
      %s336 = scalar_lea.vmem %s138, 80
      %v337 = vld [vmem:[%s336] sm:$0xf]
      %v338 = vld [vmem:[%s336 + $0x4] sm:$0xf]
      %v339 = vld [vmem:[%s336 + $0x8] sm:$0xf]
      %v340 = vld [vmem:[%s336 + $0xc] sm:$0xf]
      %s341 = scalar_lea.vmem %s1, 8
      %v342 = vld [vmem:[%s341] sm:$0x3]
      %v347 = vunpack.c.l.b16 %v337
      %v348 = vunpack.c.l.b16 %v338
      %v349 = vunpack.c.l.b16 %v339
      %v350 = vunpack.c.l.b16 %v340
      %v351 = vpack.c.b16 %v348, %v347
      %v352 = vpack.c.b16 %v350, %v349
      %v354 = vsel %vm167, %v351, 0
      %v357 = vsel %vm167, %v352, 0
      %v360 = vand.u32 %v342, %v177
      %362 = vmatpush.bf16.msra.mxu0 0
      %363 = vmatpush.bf16.msra.mxu0 0
      %364 = vmatpush.bf16.msra.mxu0 0
      %365 = vmatpush.bf16.msra.mxu0 0
      %366 = vmatpush.bf16.msra.mxu0 0
      %367 = vmatpush.bf16.msra.mxu0 0
      %368 = vmatpush.bf16.msra.mxu0 0
      %369 = vmatpush.bf16.msra.mxu0 %v360
      %370 = vmatmul.bf16.gmra.mxu0 %v354
      %v371 = vpop.f32.mrf.mxu0
      %v372 = vadd.f32 0.0, %v371
      %v373 = vpop.f32.mrf.mxu0
      %v374 = vadd.f32 0.0, %v373
      %375 = vmatmul.bf16.gmra.mxu0 %v357
      %v376 = vpop.f32.mrf.mxu0
      %v377 = vadd.f32 0.0, %v376
      %v378 = vpop.f32.mrf.mxu0
      %v379 = vadd.f32 0.0, %v378
      %380 = vdwg.mxu0
      %v381 = vadd.f32 %v332, %v372
      %v382 = vadd.f32 %v333, %v374
      %v383 = vadd.f32 %v334, %v377
      %v384 = vadd.f32 %v335, %v379
      %s385 = scalar_lea.vmem %s138, 100
      %v386 = vld [vmem:[%s385] sm:$0xf]
      %v387 = vld [vmem:[%s385 + $0x4] sm:$0xf]
      %v388 = vld [vmem:[%s385 + $0x8] sm:$0xf]
      %v389 = vld [vmem:[%s385 + $0xc] sm:$0xf]
      %s390 = scalar_lea.vmem %s1, 10
      %v391 = vld [vmem:[%s390] sm:$0x3]
      %v396 = vunpack.c.l.b16 %v386
      %v397 = vunpack.c.l.b16 %v387
      %v398 = vunpack.c.l.b16 %v388
      %v399 = vunpack.c.l.b16 %v389
      %v400 = vpack.c.b16 %v397, %v396
      %v401 = vpack.c.b16 %v399, %v398
      %v403 = vsel %vm167, %v400, 0
      %v406 = vsel %vm167, %v401, 0
      %v409 = vand.u32 %v391, %v177
      %411 = vmatpush.bf16.msra.mxu0 0
      %412 = vmatpush.bf16.msra.mxu0 0
      %413 = vmatpush.bf16.msra.mxu0 0
      %414 = vmatpush.bf16.msra.mxu0 0
      %415 = vmatpush.bf16.msra.mxu0 0
      %416 = vmatpush.bf16.msra.mxu0 0
      %417 = vmatpush.bf16.msra.mxu0 0
      %418 = vmatpush.bf16.msra.mxu0 %v409
      %419 = vmatmul.bf16.gmra.mxu0 %v403
      %v420 = vpop.f32.mrf.mxu0
      %v421 = vadd.f32 0.0, %v420
      %v422 = vpop.f32.mrf.mxu0
      %v423 = vadd.f32 0.0, %v422
      %424 = vmatmul.bf16.gmra.mxu0 %v406
      %v425 = vpop.f32.mrf.mxu0
      %v426 = vadd.f32 0.0, %v425
      %v427 = vpop.f32.mrf.mxu0
      %v428 = vadd.f32 0.0, %v427
      %429 = vdwg.mxu0
      %v430 = vadd.f32 %v381, %v421
      %v431 = vadd.f32 %v382, %v423
      %v432 = vadd.f32 %v383, %v426
      %v433 = vadd.f32 %v384, %v428
      %s434 = scalar_lea.vmem %s138, 120
      %v435 = vld [vmem:[%s434] sm:$0xf]
      %v436 = vld [vmem:[%s434 + $0x4] sm:$0xf]
      %v437 = vld [vmem:[%s434 + $0x8] sm:$0xf]
      %v438 = vld [vmem:[%s434 + $0xc] sm:$0xf]
      %s439 = scalar_lea.vmem %s1, 12
      %v440 = vld [vmem:[%s439] sm:$0x3]
      %v445 = vunpack.c.l.b16 %v435
      %v446 = vunpack.c.l.b16 %v436
      %v447 = vunpack.c.l.b16 %v437
      %v448 = vunpack.c.l.b16 %v438
      %v449 = vpack.c.b16 %v446, %v445
      %v450 = vpack.c.b16 %v448, %v447
      %v452 = vsel %vm167, %v449, 0
      %v455 = vsel %vm167, %v450, 0
      %v458 = vand.u32 %v440, %v177
      %460 = vmatpush.bf16.msra.mxu0 0
      %461 = vmatpush.bf16.msra.mxu0 0
      %462 = vmatpush.bf16.msra.mxu0 0
      %463 = vmatpush.bf16.msra.mxu0 0
      %464 = vmatpush.bf16.msra.mxu0 0
      %465 = vmatpush.bf16.msra.mxu0 0
      %466 = vmatpush.bf16.msra.mxu0 0
      %467 = vmatpush.bf16.msra.mxu0 %v458
      %468 = vmatmul.bf16.gmra.mxu0 %v452
      %v469 = vpop.f32.mrf.mxu0
      %v470 = vadd.f32 0.0, %v469
      %v471 = vpop.f32.mrf.mxu0
      %v472 = vadd.f32 0.0, %v471
      %473 = vmatmul.bf16.gmra.mxu0 %v455
      %v474 = vpop.f32.mrf.mxu0
      %v475 = vadd.f32 0.0, %v474
      %v476 = vpop.f32.mrf.mxu0
      %v477 = vadd.f32 0.0, %v476
      %478 = vdwg.mxu0
      %v479 = vadd.f32 %v430, %v470
      %v480 = vadd.f32 %v431, %v472
      %v481 = vadd.f32 %v432, %v475
      %v482 = vadd.f32 %v433, %v477
      %s483 = scalar_lea.vmem %s138, 140
      %v484 = vld [vmem:[%s483] sm:$0xf]
      %v485 = vld [vmem:[%s483 + $0x4] sm:$0xf]
      %v486 = vld [vmem:[%s483 + $0x8] sm:$0xf]
      %v487 = vld [vmem:[%s483 + $0xc] sm:$0xf]
      %s488 = scalar_lea.vmem %s1, 14
      %v489 = vld [vmem:[%s488] sm:$0x3]
      %v494 = vunpack.c.l.b16 %v484
      %v495 = vunpack.c.l.b16 %v485
      %v496 = vunpack.c.l.b16 %v486
      %v497 = vunpack.c.l.b16 %v487
      %v498 = vpack.c.b16 %v495, %v494
      %v499 = vpack.c.b16 %v497, %v496
      %v501 = vsel %vm167, %v498, 0
      %v504 = vsel %vm167, %v499, 0
      %v507 = vand.u32 %v489, %v177
      %509 = vmatpush.bf16.msra.mxu0 0
      %510 = vmatpush.bf16.msra.mxu0 0
      %511 = vmatpush.bf16.msra.mxu0 0
      %512 = vmatpush.bf16.msra.mxu0 0
      %513 = vmatpush.bf16.msra.mxu0 0
      %514 = vmatpush.bf16.msra.mxu0 0
      %515 = vmatpush.bf16.msra.mxu0 0
      %516 = vmatpush.bf16.msra.mxu0 %v507
      %517 = vmatmul.bf16.gmra.mxu0 %v501
      %v518 = vpop.f32.mrf.mxu0
      %v519 = vadd.f32 0.0, %v518
      %v520 = vpop.f32.mrf.mxu0
      %v521 = vadd.f32 0.0, %v520
      %522 = vmatmul.bf16.gmra.mxu0 %v504
      %v523 = vpop.f32.mrf.mxu0
      %v524 = vadd.f32 0.0, %v523
      %v525 = vpop.f32.mrf.mxu0
      %v526 = vadd.f32 0.0, %v525
      %527 = vdwg.mxu0
      %v528 = vadd.f32 %v479, %v519
      %v529 = vadd.f32 %v480, %v521
      %v530 = vadd.f32 %v481, %v524
      %v531 = vadd.f32 %v482, %v526
      %v532 = vld [vmem:[%s138 + $0x4] sm:$0xf]
      %v533 = vld [vmem:[%s138 + $0x8] sm:$0xf]
      %v534 = vld [vmem:[%s138 + $0xc] sm:$0xf]
      %v535 = vld [vmem:[%s138 + $0x10] sm:$0xf]
      %s536 = scalar_lea.vmem %s1, 16
      %v537 = vld [vmem:[%s536] sm:$0x3]
      %v542 = vunpack.c.l.b16 %v532
      %v543 = vunpack.c.l.b16 %v533
      %v544 = vunpack.c.l.b16 %v534
      %v545 = vunpack.c.l.b16 %v535
      %v546 = vpack.c.b16 %v543, %v542
      %v547 = vpack.c.b16 %v545, %v544
      %v549 = vsel %vm167, %v546, 0
      %v552 = vsel %vm167, %v547, 0
      %v555 = vand.u32 %v537, %v177
      %557 = vmatpush.bf16.msra.mxu0 0
      %558 = vmatpush.bf16.msra.mxu0 0
      %559 = vmatpush.bf16.msra.mxu0 0
      %560 = vmatpush.bf16.msra.mxu0 0
      %561 = vmatpush.bf16.msra.mxu0 0
      %562 = vmatpush.bf16.msra.mxu0 0
      %563 = vmatpush.bf16.msra.mxu0 0
      %564 = vmatpush.bf16.msra.mxu0 %v555
      %565 = vmatmul.bf16.gmra.mxu0 %v549
      %v566 = vpop.f32.mrf.mxu0
      %v567 = vadd.f32 0.0, %v566
      %v568 = vpop.f32.mrf.mxu0
      %v569 = vadd.f32 0.0, %v568
      %570 = vmatmul.bf16.gmra.mxu0 %v552
      %v571 = vpop.f32.mrf.mxu0
      %v572 = vadd.f32 0.0, %v571
      %v573 = vpop.f32.mrf.mxu0
      %v574 = vadd.f32 0.0, %v573
      %575 = vdwg.mxu0
      %v576 = vadd.f32 %v528, %v567
      %v577 = vadd.f32 %v529, %v569
      %v578 = vadd.f32 %v530, %v572
      %v579 = vadd.f32 %v531, %v574
      %v580 = vld [vmem:[%s150 + $0x4] sm:$0xf]
      %v581 = vld [vmem:[%s150 + $0x8] sm:$0xf]
      %v582 = vld [vmem:[%s150 + $0xc] sm:$0xf]
      %v583 = vld [vmem:[%s150 + $0x10] sm:$0xf]
      %s584 = scalar_lea.vmem %s1, 18
      %v585 = vld [vmem:[%s584] sm:$0x3]
      %v590 = vunpack.c.l.b16 %v580
      %v591 = vunpack.c.l.b16 %v581
      %v592 = vunpack.c.l.b16 %v582
      %v593 = vunpack.c.l.b16 %v583
      %v594 = vpack.c.b16 %v591, %v590
      %v595 = vpack.c.b16 %v593, %v592
      %v597 = vsel %vm167, %v594, 0
      %v600 = vsel %vm167, %v595, 0
      %v603 = vand.u32 %v585, %v177
      %605 = vmatpush.bf16.msra.mxu0 0
      %606 = vmatpush.bf16.msra.mxu0 0
      %607 = vmatpush.bf16.msra.mxu0 0
      %608 = vmatpush.bf16.msra.mxu0 0
      %609 = vmatpush.bf16.msra.mxu0 0
      %610 = vmatpush.bf16.msra.mxu0 0
      %611 = vmatpush.bf16.msra.mxu0 0
      %612 = vmatpush.bf16.msra.mxu0 %v603
      %613 = vmatmul.bf16.gmra.mxu0 %v597
      %v614 = vpop.f32.mrf.mxu0
      %v615 = vadd.f32 0.0, %v614
      %v616 = vpop.f32.mrf.mxu0
      %v617 = vadd.f32 0.0, %v616
      %618 = vmatmul.bf16.gmra.mxu0 %v600
      %v619 = vpop.f32.mrf.mxu0
      %v620 = vadd.f32 0.0, %v619
      %v621 = vpop.f32.mrf.mxu0
      %v622 = vadd.f32 0.0, %v621
      %623 = vdwg.mxu0
      %v624 = vadd.f32 %v576, %v615
      %v625 = vadd.f32 %v577, %v617
      %v626 = vadd.f32 %v578, %v620
      %v627 = vadd.f32 %v579, %v622
      %v628 = vld [vmem:[%s238 + $0x4] sm:$0xf]
      %v629 = vld [vmem:[%s238 + $0x8] sm:$0xf]
      %v630 = vld [vmem:[%s238 + $0xc] sm:$0xf]
      %v631 = vld [vmem:[%s238 + $0x10] sm:$0xf]
      %s632 = scalar_lea.vmem %s1, 20
      %v633 = vld [vmem:[%s632] sm:$0x3]
      %v638 = vunpack.c.l.b16 %v628
      %v639 = vunpack.c.l.b16 %v629
      %v640 = vunpack.c.l.b16 %v630
      %v641 = vunpack.c.l.b16 %v631
      %v642 = vpack.c.b16 %v639, %v638
      %v643 = vpack.c.b16 %v641, %v640
      %v645 = vsel %vm167, %v642, 0
      %v648 = vsel %vm167, %v643, 0
      %v651 = vand.u32 %v633, %v177
      %653 = vmatpush.bf16.msra.mxu0 0
      %654 = vmatpush.bf16.msra.mxu0 0
      %655 = vmatpush.bf16.msra.mxu0 0
      %656 = vmatpush.bf16.msra.mxu0 0
      %657 = vmatpush.bf16.msra.mxu0 0
      %658 = vmatpush.bf16.msra.mxu0 0
      %659 = vmatpush.bf16.msra.mxu0 0
      %660 = vmatpush.bf16.msra.mxu0 %v651
      %661 = vmatmul.bf16.gmra.mxu0 %v645
      %v662 = vpop.f32.mrf.mxu0
      %v663 = vadd.f32 0.0, %v662
      %v664 = vpop.f32.mrf.mxu0
      %v665 = vadd.f32 0.0, %v664
      %666 = vmatmul.bf16.gmra.mxu0 %v648
      %v667 = vpop.f32.mrf.mxu0
      %v668 = vadd.f32 0.0, %v667
      %v669 = vpop.f32.mrf.mxu0
      %v670 = vadd.f32 0.0, %v669
      %671 = vdwg.mxu0
      %v672 = vadd.f32 %v624, %v663
      %v673 = vadd.f32 %v625, %v665
      %v674 = vadd.f32 %v626, %v668
      %v675 = vadd.f32 %v627, %v670
      %v676 = vld [vmem:[%s287 + $0x4] sm:$0xf]
      %v677 = vld [vmem:[%s287 + $0x8] sm:$0xf]
      %v678 = vld [vmem:[%s287 + $0xc] sm:$0xf]
      %v679 = vld [vmem:[%s287 + $0x10] sm:$0xf]
      %s680 = scalar_lea.vmem %s1, 22
      %v681 = vld [vmem:[%s680] sm:$0x3]
      %v686 = vunpack.c.l.b16 %v676
      %v687 = vunpack.c.l.b16 %v677
      %v688 = vunpack.c.l.b16 %v678
      %v689 = vunpack.c.l.b16 %v679
      %v690 = vpack.c.b16 %v687, %v686
      %v691 = vpack.c.b16 %v689, %v688
      %v693 = vsel %vm167, %v690, 0
      %v696 = vsel %vm167, %v691, 0
      %v699 = vand.u32 %v681, %v177
      %701 = vmatpush.bf16.msra.mxu0 0
      %702 = vmatpush.bf16.msra.mxu0 0
      %703 = vmatpush.bf16.msra.mxu0 0
      %704 = vmatpush.bf16.msra.mxu0 0
      %705 = vmatpush.bf16.msra.mxu0 0
      %706 = vmatpush.bf16.msra.mxu0 0
      %707 = vmatpush.bf16.msra.mxu0 0
      %708 = vmatpush.bf16.msra.mxu0 %v699
      %709 = vmatmul.bf16.gmra.mxu0 %v693
      %v710 = vpop.f32.mrf.mxu0
      %v711 = vadd.f32 0.0, %v710
      %v712 = vpop.f32.mrf.mxu0
      %v713 = vadd.f32 0.0, %v712
      %714 = vmatmul.bf16.gmra.mxu0 %v696
      %v715 = vpop.f32.mrf.mxu0
      %v716 = vadd.f32 0.0, %v715
      %v717 = vpop.f32.mrf.mxu0
      %v718 = vadd.f32 0.0, %v717
      %719 = vdwg.mxu0
      %v720 = vadd.f32 %v672, %v711
      %v721 = vadd.f32 %v673, %v713
      %v722 = vadd.f32 %v674, %v716
      %v723 = vadd.f32 %v675, %v718
      %v724 = vld [vmem:[%s336 + $0x4] sm:$0xf]
      %v725 = vld [vmem:[%s336 + $0x8] sm:$0xf]
      %v726 = vld [vmem:[%s336 + $0xc] sm:$0xf]
      %v727 = vld [vmem:[%s336 + $0x10] sm:$0xf]
      %s728 = scalar_lea.vmem %s1, 24
      %v729 = vld [vmem:[%s728] sm:$0x3]
      %v734 = vunpack.c.l.b16 %v724
      %v735 = vunpack.c.l.b16 %v725
      %v736 = vunpack.c.l.b16 %v726
      %v737 = vunpack.c.l.b16 %v727
      %v738 = vpack.c.b16 %v735, %v734
      %v739 = vpack.c.b16 %v737, %v736
      %v741 = vsel %vm167, %v738, 0
      %v744 = vsel %vm167, %v739, 0
      %v747 = vand.u32 %v729, %v177
      %749 = vmatpush.bf16.msra.mxu0 0
      %750 = vmatpush.bf16.msra.mxu0 0
      %751 = vmatpush.bf16.msra.mxu0 0
      %752 = vmatpush.bf16.msra.mxu0 0
      %753 = vmatpush.bf16.msra.mxu0 0
      %754 = vmatpush.bf16.msra.mxu0 0
      %755 = vmatpush.bf16.msra.mxu0 0
      %756 = vmatpush.bf16.msra.mxu0 %v747
      %757 = vmatmul.bf16.gmra.mxu0 %v741
      %v758 = vpop.f32.mrf.mxu0
      %v759 = vadd.f32 0.0, %v758
      %v760 = vpop.f32.mrf.mxu0
      %v761 = vadd.f32 0.0, %v760
      %762 = vmatmul.bf16.gmra.mxu0 %v744
      %v763 = vpop.f32.mrf.mxu0
      %v764 = vadd.f32 0.0, %v763
      %v765 = vpop.f32.mrf.mxu0
      %v766 = vadd.f32 0.0, %v765
      %767 = vdwg.mxu0
      %v768 = vadd.f32 %v720, %v759
      %v769 = vadd.f32 %v721, %v761
      %v770 = vadd.f32 %v722, %v764
      %v771 = vadd.f32 %v723, %v766
      %v772 = vld [vmem:[%s385 + $0x4] sm:$0xf]
      %v773 = vld [vmem:[%s385 + $0x8] sm:$0xf]
      %v774 = vld [vmem:[%s385 + $0xc] sm:$0xf]
      %v775 = vld [vmem:[%s385 + $0x10] sm:$0xf]
      %s776 = scalar_lea.vmem %s1, 26
      %v777 = vld [vmem:[%s776] sm:$0x3]
      %v782 = vunpack.c.l.b16 %v772
      %v783 = vunpack.c.l.b16 %v773
      %v784 = vunpack.c.l.b16 %v774
      %v785 = vunpack.c.l.b16 %v775
      %v786 = vpack.c.b16 %v783, %v782
      %v787 = vpack.c.b16 %v785, %v784
      %v789 = vsel %vm167, %v786, 0
      %v792 = vsel %vm167, %v787, 0
      %v795 = vand.u32 %v777, %v177
      %797 = vmatpush.bf16.msra.mxu0 0
      %798 = vmatpush.bf16.msra.mxu0 0
      %799 = vmatpush.bf16.msra.mxu0 0
      %800 = vmatpush.bf16.msra.mxu0 0
      %801 = vmatpush.bf16.msra.mxu0 0
      %802 = vmatpush.bf16.msra.mxu0 0
      %803 = vmatpush.bf16.msra.mxu0 0
      %804 = vmatpush.bf16.msra.mxu0 %v795
      %805 = vmatmul.bf16.gmra.mxu0 %v789
      %v806 = vpop.f32.mrf.mxu0
      %v807 = vadd.f32 0.0, %v806
      %v808 = vpop.f32.mrf.mxu0
      %v809 = vadd.f32 0.0, %v808
      %810 = vmatmul.bf16.gmra.mxu0 %v792
      %v811 = vpop.f32.mrf.mxu0
      %v812 = vadd.f32 0.0, %v811
      %v813 = vpop.f32.mrf.mxu0
      %v814 = vadd.f32 0.0, %v813
      %815 = vdwg.mxu0
      %v816 = vadd.f32 %v768, %v807
      %v817 = vadd.f32 %v769, %v809
      %v818 = vadd.f32 %v770, %v812
      %v819 = vadd.f32 %v771, %v814
      %v820 = vld [vmem:[%s434 + $0x4] sm:$0xf]
      %v821 = vld [vmem:[%s434 + $0x8] sm:$0xf]
      %v822 = vld [vmem:[%s434 + $0xc] sm:$0xf]
      %v823 = vld [vmem:[%s434 + $0x10] sm:$0xf]
      %s824 = scalar_lea.vmem %s1, 28
      %v825 = vld [vmem:[%s824] sm:$0x3]
      %v830 = vunpack.c.l.b16 %v820
      %v831 = vunpack.c.l.b16 %v821
      %v832 = vunpack.c.l.b16 %v822
      %v833 = vunpack.c.l.b16 %v823
      %v834 = vpack.c.b16 %v831, %v830
      %v835 = vpack.c.b16 %v833, %v832
      %v837 = vsel %vm167, %v834, 0
      %v840 = vsel %vm167, %v835, 0
      %v843 = vand.u32 %v825, %v177
      %845 = vmatpush.bf16.msra.mxu0 0
      %846 = vmatpush.bf16.msra.mxu0 0
      %847 = vmatpush.bf16.msra.mxu0 0
      %848 = vmatpush.bf16.msra.mxu0 0
      %849 = vmatpush.bf16.msra.mxu0 0
      %850 = vmatpush.bf16.msra.mxu0 0
      %851 = vmatpush.bf16.msra.mxu0 0
      %852 = vmatpush.bf16.msra.mxu0 %v843
      %853 = vmatmul.bf16.gmra.mxu0 %v837
      %v854 = vpop.f32.mrf.mxu0
      %v855 = vadd.f32 0.0, %v854
      %v856 = vpop.f32.mrf.mxu0
      %v857 = vadd.f32 0.0, %v856
      %858 = vmatmul.bf16.gmra.mxu0 %v840
      %v859 = vpop.f32.mrf.mxu0
      %v860 = vadd.f32 0.0, %v859
      %v861 = vpop.f32.mrf.mxu0
      %v862 = vadd.f32 0.0, %v861
      %863 = vdwg.mxu0
      %v864 = vadd.f32 %v816, %v855
      %v865 = vadd.f32 %v817, %v857
      %v866 = vadd.f32 %v818, %v860
      %v867 = vadd.f32 %v819, %v862
      %v868 = vld [vmem:[%s483 + $0x4] sm:$0xf]
      %v869 = vld [vmem:[%s483 + $0x8] sm:$0xf]
      %v870 = vld [vmem:[%s483 + $0xc] sm:$0xf]
      %v871 = vld [vmem:[%s483 + $0x10] sm:$0xf]
      %s872 = scalar_lea.vmem %s1, 30
      %v873 = vld [vmem:[%s872] sm:$0x3]
      %v878 = vunpack.c.l.b16 %v868
      %v879 = vunpack.c.l.b16 %v869
      %v880 = vunpack.c.l.b16 %v870
      %v881 = vunpack.c.l.b16 %v871
      %v882 = vpack.c.b16 %v879, %v878
      %v883 = vpack.c.b16 %v881, %v880
      %v885 = vsel %vm167, %v882, 0
      %v888 = vsel %vm167, %v883, 0
      %v891 = vand.u32 %v873, %v177
      %893 = vmatpush.bf16.msra.mxu0 0
      %894 = vmatpush.bf16.msra.mxu0 0
      %895 = vmatpush.bf16.msra.mxu0 0
      %896 = vmatpush.bf16.msra.mxu0 0
      %897 = vmatpush.bf16.msra.mxu0 0
      %898 = vmatpush.bf16.msra.mxu0 0
      %899 = vmatpush.bf16.msra.mxu0 0
      %900 = vmatpush.bf16.msra.mxu0 %v891
      %901 = vmatmul.bf16.gmra.mxu0 %v885
      %v902 = vpop.f32.mrf.mxu0
      %v903 = vadd.f32 0.0, %v902
      %v904 = vpop.f32.mrf.mxu0
      %v905 = vadd.f32 0.0, %v904
      %906 = vmatmul.bf16.gmra.mxu0 %v888
      %v907 = vpop.f32.mrf.mxu0
      %v908 = vadd.f32 0.0, %v907
      %v909 = vpop.f32.mrf.mxu0
      %v910 = vadd.f32 0.0, %v909
      %911 = vdwg.mxu0
      %v912 = vadd.f32 %v864, %v903
      %v913 = vadd.f32 %v865, %v905
      %v914 = vadd.f32 %v866, %v908
      %v915 = vadd.f32 %v867, %v910
      %v916 = vpack.c.bf16 %v912, %v912
      %v917 = vpack.c.bf16 %v913, %v913
      %v918 = vpack.c.bf16 %v914, %v914
      %v919 = vpack.c.bf16 %v915, %v915
      %vm920 = vcmask 60416
      %921 = vst.msk [vmem:[%s143] sm:$0xf] %vm920, %v916
      %922 = vst.msk [vmem:[%s143 + $0x4] sm:$0xf] %vm920, %v917
      %923 = vst.msk [vmem:[%s143 + $0x8] sm:$0xf] %vm920, %v918
      %924 = vst.msk [vmem:[%s143 + $0xc] sm:$0xf] %vm920, %v919
      %p925 = scmp.lt.s32.totalorder %s13, 1
      %s926 = scalar_select %p925, %s13, 1
      %s927 = smul.addr %s926, 4
      %s928 = smul.addr %s927, 4
      %s929 = scalar_lea.vmem %s2, %s928
      // Predicated region
      $region29: #{tpu_custom_call.1} parent=27 // pred_check
        %p930 = pneg %p78
      $region30: #{tpu_custom_call.1} parent=27 // pred_check_branch
        %932 = sbr.rel (%p930) target = $region32
      $region31: #{tpu_custom_call.1} parent=27 // pred_region
        _
      $region32: #{tpu_custom_call.1} parent=27 // pred_fallthru
        _
    $region28: #{tpu_custom_call.1} parent=5 // pred_fallthru
      _
    %p933 = scmp.le.s32.totalorder 2, %s8
    // Predicated region
    $region33: #{tpu_custom_call.1} parent=5 // pred_check
      %p934 = pneg %p933
    $region34: #{tpu_custom_call.1} parent=5 // pred_check_branch
      %936 = sbr.rel (%p934) target = $region36
    $region35: #{tpu_custom_call.1} parent=5 // pred_region
      %s937 = ssub.s32 %s8, 2
      // Predicated region
      $region37: #{tpu_custom_call.1} parent=35 // pred_check
        %p938 = pneg %p84
      $region38: #{tpu_custom_call.1} parent=35 // pred_check_branch
        %940 = sbr.rel (%p938) target = $region40
      $region39: #{tpu_custom_call.1} parent=35 // pred_region
        %p941 = scmp.lt.s32.totalorder %s14, 1
        %s942 = scalar_select %p941, %s14, 1
        %s943 = smul.addr %s942, 4
        %s944 = smul.addr %s943, 4
        %s945 = scalar_lea.vmem %s2, %s944
      $region40: #{tpu_custom_call.1} parent=35 // pred_fallthru
        _
    $region36: #{tpu_custom_call.1} parent=5 // pred_fallthru
      _
  $region6: #{tpu_custom_call.1} parent=0 // loop_footer
    %s12 = sadd.s32 1, %s8
  $region7: #{tpu_custom_call.1} parent=0 // loop_footer_branch
    %7 = sbr.rel target = $region3
  $region8: #{tpu_custom_call.1} parent=0 // loop_exit
    _

</llo_original>
